<compile_context>
chip_gen: v7x
topology: tpu7x:2x2x1
jax: 0.10.0
libtpu: 0.0.40
codegen_flags: <defaults>
</compile_context>

<pallas_src>
import functools

import jax
import jax.numpy as jnp
from jax.experimental import pallas as pl
from jax.experimental.pallas import tpu as pltpu


# ----------------------------------------------------------------------------
# Kernel
# ----------------------------------------------------------------------------
def _dilation_dense_kernel(xlin_ref, w_ref, b_ref, out_ref, patch_ref, *, H, W):
    """Fused dilated conv (k=3, dilation=2, pad=2) + bias + ReLU + concat.

    xlin_ref : (1, Cin, L)        flattened NCHW image, zero-padded by P = 2*W + 2
                                  on each side of the flat spatial axis (L = H*W + 2P).
    w_ref    : (Cout, 9*Cin)      im2col weight; column index = (kh*3 + kw)*Cin + ci.
    b_ref    : (Cout, 1)
    out_ref  : (1, Cin+Cout, H*W) rows [:Cin] = x, rows [Cin:] = relu(conv(x) + b).
    patch_ref: (9*Cin, H*W)       VMEM im2col staging buffer.
    """
    Cin = xlin_ref.shape[1]
    Cout = w_ref.shape[0]
    HW = H * W
    xlin = xlin_ref[0]                                    # (Cin, L)

    # Column coordinate (w) of every flattened output position.  Used to zero the
    # horizontal taps that read outside the image; the vertical out-of-range taps
    # already read zeros from the flat padding.
    lane = jax.lax.broadcasted_iota(jnp.int32, (Cin, HW), 1)
    if (W & (W - 1)) == 0:
        col = lane & (W - 1)
    else:
        col = lane % W
    left_ok = col >= 2             # tap column (w - 2) is inside the image
    right_ok = col < (W - 2)       # tap column (w + 2) is inside the image

    x_center = None
    for kh in range(3):
        for kw in range(3):
            # Output position p = h*W + w reads flat-padded index p + 2*(kh*W + kw)
            # == x[h + 2*(kh-1), w + 2*(kw-1)] (vertical padding handled by zeros,
            # horizontal wrap handled by the column masks).
            off = 2 * (kh * W + kw)
            win = jax.lax.slice(xlin, (0, off), (Cin, off + HW))   # (Cin, HW)
            if kw == 0:
                win = jnp.where(left_ok, win, 0.0)
            elif kw == 2:
                win = jnp.where(right_ok, win, 0.0)
            t = kh * 3 + kw
            patch_ref[t * Cin:(t + 1) * Cin, :] = win
            if kh == 1 and kw == 1:
                x_center = win     # unshifted, unmasked image -> reused for the concat

    # Single lane-dense MXU matmul: (Cout, 9*Cin) @ (9*Cin, H*W), f32 accumulation.
    y = jnp.dot(w_ref[...], patch_ref[...], preferred_element_type=jnp.float32)
    y = jnp.maximum(y + b_ref[...], 0.0)

    # Fused torch.cat((x, out), dim=1): write both halves of the output slab.
    out_ref[0, pl.ds(0, Cin), :] = x_center
    out_ref[0, pl.ds(Cin, Cout), :] = y


# ----------------------------------------------------------------------------
# Wrapper (NCHW in / NCHW out, matching the PyTorch module)
# ----------------------------------------------------------------------------
def make_dilation_dense(x_nchw, weight, bias):
    """x: (B, Cin, H, W); weight: (Cout, Cin, 3, 3) [PyTorch layout]; bias: (Cout,).

    Returns (B, Cin + Cout, H, W) == torch.cat((x, relu(conv(x))), dim=1).
    """
    B, Cin, H, W = x_nchw.shape
    Cout = weight.shape[0]
    HW = H * W
    P = 2 * W + 2                       # covers 2 rows of vertical pad + 2 cols of slack
    L = HW + 2 * P

    xflat = x_nchw.reshape(B, Cin, HW).astype(jnp.float32)
    xlin = jnp.pad(xflat, ((0, 0), (0, 0), (P, P)))                      # (B, Cin, L)
    wmat = jnp.transpose(weight, (0, 2, 3, 1)).reshape(Cout, 9 * Cin)    # (Cout, 9*Cin)
    wmat = wmat.astype(jnp.float32)
    bcol = bias.reshape(Cout, 1).astype(jnp.float32)

    kernel = functools.partial(_dilation_dense_kernel, H=H, W=W)
    out = pl.pallas_call(
        kernel,
        out_shape=jax.ShapeDtypeStruct((B, Cin + Cout, HW), jnp.float32),
        grid_spec=pltpu.PrefetchScalarGridSpec(
            num_scalar_prefetch=0,
            grid=(B,),
            in_specs=[
                pl.BlockSpec((1, Cin, L), lambda b: (b, 0, 0)),
                pl.BlockSpec((Cout, 9 * Cin), lambda b: (0, 0)),
                pl.BlockSpec((Cout, 1), lambda b: (0, 0)),
            ],
            out_specs=pl.BlockSpec((1, Cin + Cout, HW), lambda b: (b, 0, 0)),
            scratch_shapes=[pltpu.VMEM((9 * Cin, HW), jnp.float32)],
        ),
        compiler_params=pltpu.CompilerParams(
            dimension_semantics=("parallel",)),
    )(xlin, wmat, bcol)
    # Free metadata reshape of the contiguous last dim back to (H, W).
    return out.reshape(B, Cin + Cout, H, W)


make_dilation_dense_jit = jax.jit(make_dilation_dense)


# ----------------------------------------------------------------------------
# Pure-JAX reference (lax conv) for sanity checking
# ----------------------------------------------------------------------------
def make_dilation_dense_reference(x_nchw, weight, bias):
    y = jax.lax.conv_general_dilated(
        x_nchw.astype(jnp.float32), weight.astype(jnp.float32),
        window_strides=(1, 1), padding=((2, 2), (2, 2)), rhs_dilation=(2, 2),
        dimension_numbers=("NCHW", "OIHW", "NCHW"))
    y = jax.nn.relu(y + bias.reshape(1, -1, 1, 1))
    return jnp.concatenate([x_nchw, y], axis=1)


if __name__ == "__main__":
    # Small shapes consistent with the module: nChannels=4, growthRate=4,
    # x: (B=2, C=4, H=16, W=16) in NCHW (PyTorch convention).
    n_channels, growth_rate = 4, 4
    B, H, W = 2, 16, 16

    key = jax.random.PRNGKey(0)
    kx, kw, kb = jax.random.split(key, 3)
    x = jax.random.normal(kx, (B, n_channels, H, W), jnp.float32)
    fan_in = n_channels * 9
    bound = 1.0 / (fan_in ** 0.5)
    weight = jax.random.uniform(kw, (growth_rate, n_channels, 3, 3), jnp.float32,
                                -bound, bound)
    bias = jax.random.uniform(kb, (growth_rate,), jnp.float32, -bound, bound)

    out = make_dilation_dense_jit(x, weight, bias)
    out = jax.block_until_ready(out)

    ref = make_dilation_dense_reference(x, weight, bias)
    assert out.shape == (B, n_channels + growth_rate, H, W)
    assert jnp.allclose(out, ref, atol=1e-2, rtol=1e-2), \
        float(jnp.max(jnp.abs(out - ref)))

    print("KERNEL_OK")
</pallas_src>

<mosaic_0001>
module attributes {stable_mosaic.version = 11 : i64} {
  func.func @_dilation_dense_kernel(%arg0: i32, %arg1: memref<1x4x324xf32, #tpu.memory_space<vmem>>, %arg2: memref<4x36xf32, #tpu.memory_space<vmem>>, %arg3: memref<4x1xf32, #tpu.memory_space<vmem>>, %arg4: memref<1x8x256xf32, #tpu.memory_space<vmem>>, %arg5: memref<36x256xf32, #tpu.memory_space<vmem>>) attributes {dimension_semantics = [#tpu.dimension_semantics<parallel>], iteration_bounds = array<i64: 2>, scalar_prefetch = 0 : i64, scratch_operands = 1 : i64, tpu.core_type = #tpu.core_type<tc>, window_params = [{transform_indices = @transform_0, window_bounds = array<i64: 1, 4, 324>}, {pipeline_mode = #tpu.pipeline_mode<synchronous>, transform_indices = @transform_1, window_bounds = array<i64: 4, 36>}, {pipeline_mode = #tpu.pipeline_mode<synchronous>, transform_indices = @transform_2, window_bounds = array<i64: 4, 1>}, {transform_indices = @transform_3, window_bounds = array<i64: 1, 8, 256>}]} {
    %c0 = arith.constant 0 : index
    %c0_0 = arith.constant 0 : index
    %c0_1 = arith.constant 0 : index
    %0 = vector.load %arg1[%c0, %c0_0, %c0_1] : memref<1x4x324xf32, #tpu.memory_space<vmem>>, vector<1x4x324xf32>
    %1 = vector.shape_cast %0 : vector<1x4x324xf32> to vector<4x324xf32>
    %2 = tpu.iota {dimensions = array<i32: 1>} : vector<4x256xi32>
    %c15_i32 = arith.constant 15 : i32
    %3 = vector.broadcast %c15_i32 : i32 to vector<4x256xi32>
    %4 = arith.andi %2, %3 : vector<4x256xi32>
    %c2_i32 = arith.constant 2 : i32
    %5 = vector.broadcast %c2_i32 : i32 to vector<4x256xi32>
    %6 = arith.cmpi sge, %4, %5 : vector<4x256xi32>
    %c14_i32 = arith.constant 14 : i32
    %7 = vector.broadcast %c14_i32 : i32 to vector<4x256xi32>
    %8 = arith.cmpi slt, %4, %7 : vector<4x256xi32>
    %9 = vector.extract_strided_slice %1 {offsets = [0, 0], sizes = [4, 256], strides = [1, 1]} : vector<4x324xf32> to vector<4x256xf32>
    %cst = arith.constant 0.000000e+00 : f32
    %10 = vector.broadcast %cst : f32 to vector<4x256xf32>
    %11 = arith.select %6, %9, %10 : vector<4x256xi1>, vector<4x256xf32>
    %c0_2 = arith.constant 0 : index
    %c0_3 = arith.constant 0 : index
    %12 = vector.load %arg5[%c0_2, %c0_3] : memref<36x256xf32, #tpu.memory_space<vmem>>, vector<4x256xf32>
    tpu.vector_store %arg5[%c0_2, %c0_3], %11 {strides = array<i32>} : memref<36x256xf32, #tpu.memory_space<vmem>>, vector<4x256xf32>,
    %13 = vector.extract_strided_slice %1 {offsets = [0, 2], sizes = [4, 256], strides = [1, 1]} : vector<4x324xf32> to vector<4x256xf32>
    %c4 = arith.constant 4 : index
    %c0_4 = arith.constant 0 : index
    %14 = vector.load %arg5[%c4, %c0_4] : memref<36x256xf32, #tpu.memory_space<vmem>>, vector<4x256xf32>
    tpu.vector_store %arg5[%c4, %c0_4], %13 {strides = array<i32>} : memref<36x256xf32, #tpu.memory_space<vmem>>, vector<4x256xf32>,
    %15 = vector.extract_strided_slice %1 {offsets = [0, 4], sizes = [4, 256], strides = [1, 1]} : vector<4x324xf32> to vector<4x256xf32>
    %cst_5 = arith.constant 0.000000e+00 : f32
    %16 = vector.broadcast %cst_5 : f32 to vector<4x256xf32>
    %17 = arith.select %8, %15, %16 : vector<4x256xi1>, vector<4x256xf32>
    %c8 = arith.constant 8 : index
    %c0_6 = arith.constant 0 : index
    %18 = vector.load %arg5[%c8, %c0_6] : memref<36x256xf32, #tpu.memory_space<vmem>>, vector<4x256xf32>
    tpu.vector_store %arg5[%c8, %c0_6], %17 {strides = array<i32>} : memref<36x256xf32, #tpu.memory_space<vmem>>, vector<4x256xf32>,
    %19 = vector.extract_strided_slice %1 {offsets = [0, 32], sizes = [4, 256], strides = [1, 1]} : vector<4x324xf32> to vector<4x256xf32>
    %cst_7 = arith.constant 0.000000e+00 : f32
    %20 = vector.broadcast %cst_7 : f32 to vector<4x256xf32>
    %21 = arith.select %6, %19, %20 : vector<4x256xi1>, vector<4x256xf32>
    %c12 = arith.constant 12 : index
    %c0_8 = arith.constant 0 : index
    %22 = vector.load %arg5[%c12, %c0_8] : memref<36x256xf32, #tpu.memory_space<vmem>>, vector<4x256xf32>
    tpu.vector_store %arg5[%c12, %c0_8], %21 {strides = array<i32>} : memref<36x256xf32, #tpu.memory_space<vmem>>, vector<4x256xf32>,
    %23 = vector.extract_strided_slice %1 {offsets = [0, 34], sizes = [4, 256], strides = [1, 1]} : vector<4x324xf32> to vector<4x256xf32>
    %c16 = arith.constant 16 : index
    %c0_9 = arith.constant 0 : index
    %24 = vector.load %arg5[%c16, %c0_9] : memref<36x256xf32, #tpu.memory_space<vmem>>, vector<4x256xf32>
    tpu.vector_store %arg5[%c16, %c0_9], %23 {strides = array<i32>} : memref<36x256xf32, #tpu.memory_space<vmem>>, vector<4x256xf32>,
    %25 = vector.extract_strided_slice %1 {offsets = [0, 36], sizes = [4, 256], strides = [1, 1]} : vector<4x324xf32> to vector<4x256xf32>
    %cst_10 = arith.constant 0.000000e+00 : f32
    %26 = vector.broadcast %cst_10 : f32 to vector<4x256xf32>
    %27 = arith.select %8, %25, %26 : vector<4x256xi1>, vector<4x256xf32>
    %c20 = arith.constant 20 : index
    %c0_11 = arith.constant 0 : index
    %28 = vector.load %arg5[%c20, %c0_11] : memref<36x256xf32, #tpu.memory_space<vmem>>, vector<4x256xf32>
    tpu.vector_store %arg5[%c20, %c0_11], %27 {strides = array<i32>} : memref<36x256xf32, #tpu.memory_space<vmem>>, vector<4x256xf32>,
    %29 = vector.extract_strided_slice %1 {offsets = [0, 64], sizes = [4, 256], strides = [1, 1]} : vector<4x324xf32> to vector<4x256xf32>
    %cst_12 = arith.constant 0.000000e+00 : f32
    %30 = vector.broadcast %cst_12 : f32 to vector<4x256xf32>
    %31 = arith.select %6, %29, %30 : vector<4x256xi1>, vector<4x256xf32>
    %c24 = arith.constant 24 : index
    %c0_13 = arith.constant 0 : index
    %32 = vector.load %arg5[%c24, %c0_13] : memref<36x256xf32, #tpu.memory_space<vmem>>, vector<4x256xf32>
    tpu.vector_store %arg5[%c24, %c0_13], %31 {strides = array<i32>} : memref<36x256xf32, #tpu.memory_space<vmem>>, vector<4x256xf32>,
    %33 = vector.extract_strided_slice %1 {offsets = [0, 66], sizes = [4, 256], strides = [1, 1]} : vector<4x324xf32> to vector<4x256xf32>
    %c28 = arith.constant 28 : index
    %c0_14 = arith.constant 0 : index
    %34 = vector.load %arg5[%c28, %c0_14] : memref<36x256xf32, #tpu.memory_space<vmem>>, vector<4x256xf32>
    tpu.vector_store %arg5[%c28, %c0_14], %33 {strides = array<i32>} : memref<36x256xf32, #tpu.memory_space<vmem>>, vector<4x256xf32>,
    %35 = vector.extract_strided_slice %1 {offsets = [0, 68], sizes = [4, 256], strides = [1, 1]} : vector<4x324xf32> to vector<4x256xf32>
    %cst_15 = arith.constant 0.000000e+00 : f32
    %36 = vector.broadcast %cst_15 : f32 to vector<4x256xf32>
    %37 = arith.select %8, %35, %36 : vector<4x256xi1>, vector<4x256xf32>
    %c32 = arith.constant 32 : index
    %c0_16 = arith.constant 0 : index
    %38 = vector.load %arg5[%c32, %c0_16] : memref<36x256xf32, #tpu.memory_space<vmem>>, vector<4x256xf32>
    tpu.vector_store %arg5[%c32, %c0_16], %37 {strides = array<i32>} : memref<36x256xf32, #tpu.memory_space<vmem>>, vector<4x256xf32>,
    %c0_17 = arith.constant 0 : index
    %c0_18 = arith.constant 0 : index
    %39 = vector.load %arg2[%c0_17, %c0_18] : memref<4x36xf32, #tpu.memory_space<vmem>>, vector<4x36xf32>
    %c0_19 = arith.constant 0 : index
    %c0_20 = arith.constant 0 : index
    %40 = vector.load %arg5[%c0_19, %c0_20] : memref<36x256xf32, #tpu.memory_space<vmem>>, vector<36x256xf32>
    %cst_21 = arith.constant dense<0.000000e+00> : vector<4x256xf32>
    %41 = tpu.matmul %39, %40, %cst_21 {dimension_numbers = #tpu.dot_dimension_numbers<[1], [0], [0], [1], [0, 0, 1, 1], [], []>} : vector<4x36xf32>, vector<36x256xf32>, vector<4x256xf32> -> vector<4x256xf32>
    %c0_22 = arith.constant 0 : index
    %c0_23 = arith.constant 0 : index
    %42 = vector.load %arg3[%c0_22, %c0_23] : memref<4x1xf32, #tpu.memory_space<vmem>>, vector<4x1xf32>
    %43 = vector.broadcast %42 : vector<4x1xf32> to vector<4x256xf32>
    %44 = arith.addf %41, %43 : vector<4x256xf32>
    %cst_24 = arith.constant 0.000000e+00 : f32
    %45 = vector.broadcast %cst_24 : f32 to vector<4x256xf32>
    %46 = arith.maximumf %44, %45 : vector<4x256xf32>
    %c0_25 = arith.constant 0 : index
    %c0_26 = arith.constant 0 : index
    %c0_27 = arith.constant 0 : index
    %47 = vector.load %arg4[%c0_25, %c0_26, %c0_27] : memref<1x8x256xf32, #tpu.memory_space<vmem>>, vector<1x4x256xf32>
    %48 = vector.shape_cast %47 : vector<1x4x256xf32> to vector<4x256xf32>
    %49 = vector.shape_cast %23 : vector<4x256xf32> to vector<1x4x256xf32>
    tpu.vector_store %arg4[%c0_25, %c0_26, %c0_27], %49 {strides = array<i32>} : memref<1x8x256xf32, #tpu.memory_space<vmem>>, vector<1x4x256xf32>,
    %c0_28 = arith.constant 0 : index
    %c4_29 = arith.constant 4 : index
    %c0_30 = arith.constant 0 : index
    %50 = vector.load %arg4[%c0_28, %c4_29, %c0_30] : memref<1x8x256xf32, #tpu.memory_space<vmem>>, vector<1x4x256xf32>
    %51 = vector.shape_cast %50 : vector<1x4x256xf32> to vector<4x256xf32>
    %52 = vector.shape_cast %46 : vector<4x256xf32> to vector<1x4x256xf32>
    tpu.vector_store %arg4[%c0_28, %c4_29, %c0_30], %52 {strides = array<i32>} : memref<1x8x256xf32, #tpu.memory_space<vmem>>, vector<1x4x256xf32>,
    return
  }
  func.func @transform_0(%arg0: i32) -> (i32, i32, i32) {
    %c0_i32 = arith.constant 0 : i32
    %c0_i32_0 = arith.constant 0 : i32
    %c0_i32_1 = arith.constant 0 : i32
    return %arg0, %c0_i32, %c0_i32_0 : i32, i32, i32
  }
  func.func @transform_1(%arg0: i32) -> (i32, i32) {
    %c0_i32 = arith.constant 0 : i32
    %c0_i32_0 = arith.constant 0 : i32
    %c0_i32_1 = arith.constant 0 : i32
    return %c0_i32, %c0_i32_0 : i32, i32
  }
  func.func @transform_2(%arg0: i32) -> (i32, i32) {
    %c0_i32 = arith.constant 0 : i32
    %c0_i32_0 = arith.constant 0 : i32
    %c0_i32_1 = arith.constant 0 : i32
    return %c0_i32, %c0_i32_0 : i32, i32
  }
  func.func @transform_3(%arg0: i32) -> (i32, i32, i32) {
    %c0_i32 = arith.constant 0 : i32
    %c0_i32_0 = arith.constant 0 : i32
    %c0_i32_1 = arith.constant 0 : i32
    return %arg0, %c0_i32, %c0_i32_0 : i32, i32, i32
  }
}

</mosaic_0001>

<llo_original>
// kernel: make_dilation_dense.1
$region0: #{make_dilation_dense.1}
  #allocation0 [shape = 'u32[]', space=smem, size = 0x4, offset = 0x4, fixed_abs, tag = 'smem constant byte address 0x4 - core index']
  #allocation1 [shape = 'u32[144,128]{1,0:T(1,128)}', space=vmem, size = 0x12000, scoped, tag = 'internal scratch']
  #allocation2 [shape = 'f32[36,256]{1,0:T(8,128)}', space=vmem, size = 0xa000, scoped, tag = 'scratch operand']
  %s0 = inlined_call_operand.vmem [shape: f32[2,4,324], index: 0, kind: input, shape index: {}]
  %s1 = inlined_call_operand.vmem [shape: f32[4,36], index: 1, kind: input, shape index: {}]
  %s2 = inlined_call_operand.vmem [shape: f32[4,1], index: 2, kind: input, shape index: {}]
  %s3 = inlined_call_operand.vmem [shape: f32[2,8,256], index: 3, kind: output, shape index: {}]
  %s4 = sld [smem:[#allocation0]]
  $region45: #{make_dilation_dense.1} parent=0
    _
  %s6 = ssub.s32 1, %s4
  %s7 = scalar_select 0, %s6, %s4
  loop: start=0, step=1, limit=4
  $region2: #{make_dilation_dense.1} parent=0 // loop_pre_header
    _
  $region3: #{make_dilation_dense.1} parent=0 // loop_header
    %s9 = sphi 0, %s13
    %p10 = scmp.ge.s32.totalorder %s9, 4
    %s19 = sphi 0, %s21
    %s22 = sphi 0, %s19
    %s23 = sphi 0, %s22
    %s39 = sphi 0, %s23
    %s43 = sphi 0, %s43
    %s45 = sphi 0, %s43
    %s46 = sphi 0, %s45
    %s60 = sphi 0, %s46
    %s64 = sphi 0, %s64
    %s66 = sphi 0, %s64
    %s67 = sphi 0, %s66
    %s81 = sphi 0, %s67
    %s87 = sphi 0, %s89
    %s90 = sphi 0, %s87
    %s91 = sphi 0, %s90
    %s107 = sphi 0, %s91
  $region4: #{make_dilation_dense.1} parent=0 // loop_header_branch
    %12 = sbr.rel (%p10) target = $region8
  $region5: #{make_dilation_dense.1} parent=0 // loop_body
    %s14 = ssub.s32 %s9, 1
    %s15 = ssub.s32 %s9, 2
    %s16 = sadd.s32 %s9, 1
    %s17 = ssub.s32 %s9, %s16
    %p18 = scmp.eq.s32.totalorder %s17, 0
    %s20 = sadd.s32 %s19, 1
    %s21 = scalar_select %p18, %s19, %s20
    %p24 = pneg %p18
    %p25 = scmp.eq.s32.totalorder %s9, 1
    %p26 = por %p24, %p25
    %p27 = scmp.ne.s32.totalorder %s19, %s22
    %p28 = scmp.eq.s32.totalorder %s9, 0
    %p29 = por %p27, %p28
    %p30 = scmp.ne.s32.totalorder %s19, %s22
    %p31 = scmp.eq.s32.totalorder %s14, 1
    %p32 = por %p30, %p31
    %p33 = scmp.ne.s32.totalorder %s22, %s23
    %p34 = scmp.eq.s32.totalorder %s14, 0
    %p35 = por %p33, %p34
    %p36 = scmp.ne.s32.totalorder %s22, %s23
    %p37 = scmp.eq.s32.totalorder %s15, 1
    %p38 = por %p36, %p37
    %p40 = scmp.ne.s32.totalorder %s23, %s39
    %p41 = scmp.eq.s32.totalorder %s15, 0
    %p42 = por %p40, %p41
    %s44 = sadd.s32 %s43, 1
    %p47 = scmp.eq.s32.totalorder %s9, 1
    %p48 = scmp.ne.s32.totalorder %s43, %s45
    %p49 = scmp.eq.s32.totalorder %s9, 0
    %p50 = por %p48, %p49
    %p51 = scmp.ne.s32.totalorder %s43, %s45
    %p52 = scmp.eq.s32.totalorder %s14, 1
    %p53 = por %p51, %p52
    %p54 = scmp.ne.s32.totalorder %s45, %s46
    %p55 = scmp.eq.s32.totalorder %s14, 0
    %p56 = por %p54, %p55
    %p57 = scmp.ne.s32.totalorder %s45, %s46
    %p58 = scmp.eq.s32.totalorder %s15, 1
    %p59 = por %p57, %p58
    %p61 = scmp.ne.s32.totalorder %s46, %s60
    %p62 = scmp.eq.s32.totalorder %s15, 0
    %p63 = por %p61, %p62
    %s65 = sadd.s32 %s64, 1
    %p68 = scmp.eq.s32.totalorder %s9, 1
    %p69 = scmp.ne.s32.totalorder %s64, %s66
    %p70 = scmp.eq.s32.totalorder %s9, 0
    %p71 = por %p69, %p70
    %p72 = scmp.ne.s32.totalorder %s64, %s66
    %p73 = scmp.eq.s32.totalorder %s14, 1
    %p74 = por %p72, %p73
    %p75 = scmp.ne.s32.totalorder %s66, %s67
    %p76 = scmp.eq.s32.totalorder %s14, 0
    %p77 = por %p75, %p76
    %p78 = scmp.ne.s32.totalorder %s66, %s67
    %p79 = scmp.eq.s32.totalorder %s15, 1
    %p80 = por %p78, %p79
    %p82 = scmp.ne.s32.totalorder %s67, %s81
    %p83 = scmp.eq.s32.totalorder %s15, 0
    %p84 = por %p82, %p83
    %s85 = ssub.s32 %s9, %s16
    %p86 = scmp.eq.s32.totalorder %s85, 0
    %s88 = sadd.s32 %s87, 1
    %s89 = scalar_select %p86, %s87, %s88
    %p92 = pneg %p86
    %p93 = scmp.eq.s32.totalorder %s9, 1
    %p94 = por %p92, %p93
    %p95 = scmp.ne.s32.totalorder %s87, %s90
    %p96 = scmp.eq.s32.totalorder %s9, 0
    %p97 = por %p95, %p96
    %p98 = scmp.ne.s32.totalorder %s87, %s90
    %p99 = scmp.eq.s32.totalorder %s14, 1
    %p100 = por %p98, %p99
    %p101 = scmp.ne.s32.totalorder %s90, %s91
    %p102 = scmp.eq.s32.totalorder %s14, 0
    %p103 = por %p101, %p102
    %p104 = scmp.ne.s32.totalorder %s90, %s91
    %p105 = scmp.eq.s32.totalorder %s15, 1
    %p106 = por %p104, %p105
    %p108 = scmp.ne.s32.totalorder %s91, %s107
    %p109 = scmp.eq.s32.totalorder %s15, 0
    %p110 = por %p108, %p109
    %p111 = scmp.le.s32.totalorder 1, %s9
    %p112 = scmp.lt.s32.totalorder %s9, 3
    %p113 = pnand %p111, %p112
    %p114 = pneg %p113
    // Predicated region
    $region9: #{make_dilation_dense.1} parent=5 // pred_check
      _
    $region10: #{make_dilation_dense.1} parent=5 // pred_check_branch
      %116 = sbr.rel (%p113) target = $region12
    $region11: #{make_dilation_dense.1} parent=5 // pred_region
      %s117 = ssub.s32 %s9, 1
      // Predicated region
      $region13: #{make_dilation_dense.1} parent=11 // pred_check
        %p118 = pneg %p56
      $region14: #{make_dilation_dense.1} parent=11 // pred_check_branch
        %120 = sbr.rel (%p118) target = $region16
      $region15: #{make_dilation_dense.1} parent=11 // pred_region
        _
      $region16: #{make_dilation_dense.1} parent=11 // pred_fallthru
        _
      // Predicated region
      $region17: #{make_dilation_dense.1} parent=11 // pred_check
        %p121 = pneg %p77
      $region18: #{make_dilation_dense.1} parent=11 // pred_check_branch
        %123 = sbr.rel (%p121) target = $region20
      $region19: #{make_dilation_dense.1} parent=11 // pred_region
        _
      $region20: #{make_dilation_dense.1} parent=11 // pred_fallthru
        _
    $region12: #{make_dilation_dense.1} parent=5 // pred_fallthru
      _
    %p124 = scmp.lt.s32.totalorder %s9, 2
    // Predicated region
    $region21: #{make_dilation_dense.1} parent=5 // pred_check
      %p125 = pneg %p124
    $region22: #{make_dilation_dense.1} parent=5 // pred_check_branch
      %127 = sbr.rel (%p125) target = $region24
    $region23: #{make_dilation_dense.1} parent=5 // pred_region
      // Predicated region
      $region25: #{make_dilation_dense.1} parent=23 // pred_check
        %p128 = pneg %p29
      $region26: #{make_dilation_dense.1} parent=23 // pred_check_branch
        %130 = sbr.rel (%p128) target = $region28
      $region27: #{make_dilation_dense.1} parent=23 // pred_region
        %p131 = scmp.lt.s32.totalorder %s9, 1
        %s132 = scalar_select %p131, %s9, 1
        %s133 = smul.addr %s132, 3
        %s134 = smul.addr %s133, 4
        %s135 = scalar_lea.vmem %s0, %s134
      $region28: #{make_dilation_dense.1} parent=23 // pred_fallthru
        _
    $region24: #{make_dilation_dense.1} parent=5 // pred_fallthru
      _
    %p136 = scmp.le.s32.totalorder 1, %s9
    %p137 = scmp.lt.s32.totalorder %s9, 3
    %p138 = pnand %p136, %p137
    %p139 = pneg %p138
    // Predicated region
    $region29: #{make_dilation_dense.1} parent=5 // pred_check
      _
    $region30: #{make_dilation_dense.1} parent=5 // pred_check_branch
      %141 = sbr.rel (%p138) target = $region32
    $region31: #{make_dilation_dense.1} parent=5 // pred_region
      %s142 = ssub.s32 %s9, 1
      %p143 = scmp.lt.s32.totalorder %s14, 1
      %s144 = scalar_select %p143, %s14, 1
      %s145 = smul.addr %s144, 3
      %s146 = smul.addr %s145, 4
      %s147 = scalar_lea.vmem %s0, %s146
      %p148 = pneg %p35
      %p149 = pneg %p32
      %p150 = pneg %p56
      %p151 = pneg %p53
      %p152 = pneg %p77
      %p153 = pneg %p74
      %p154 = pneg %p103
      %p155 = pneg %p100
      %p156 = scmp.lt.s32.totalorder %s14, 1
      %s157 = scalar_select %p156, %s14, 1
      %s158 = smul.addr %s157, 2
      %s159 = smul.addr %s158, 8
      %s160 = scalar_lea.vmem %s3, %s159
      %p161 = scmp.lt.s32.totalorder %s14, 1
      %s162 = scalar_select %p161, %s14, 1
      %s163 = smul.addr %s162, 3
      %s164 = smul.addr %s163, 4
      %s165 = scalar_lea.vmem %s0, %s164
      %p166 = scmp.lt.s32.totalorder %s14, 1
      %s167 = scalar_select %p166, %s14, 1
      %s168 = smul.addr %s167, 2
      %s169 = smul.addr %s168, 8
      %s170 = scalar_lea.vmem %s3, %s169
      %v171 = vld [vmem:[%s165] sm:$0xff]
      %v172 = vld [vmem:[%s165 + $0x8] sm:$0xf]
      %v173 = vlaneseq
      %v174 = vand.u32 %v173, 127
      %v175 = vadd.s32 %v174, 128
      %v176 = vand.u32 %v174, 15
      %v177 = vand.u32 %v175, 15
      %vm178 = vcmp.ge.s32.totalorder %v176, 2
      %vm179 = vcmp.ge.s32.totalorder %v177, 2
      %vm180 = vcmp.lt.s32.totalorder %v176, 14
      %vm181 = vcmp.lt.s32.totalorder %v177, 14
      %v183 = vcombine.high %v171, %v171
      %v185 = vsel %vm178, %v171, 0.0
      %v186 = vsel %vm179, %v183, 0.0
      %187 = vst [vmem:[#allocation2] sm:$0xf] %v185
      %188 = vst [vmem:[#allocation2 + $0x8] sm:$0xf] %v186
      %v190 = vcombine.low %v171, %v171
      %v191 = vcombine.low %v172, %v172
      %192 = vrot.lane.b32.xlu0 %v190, 126
      %v193 = vpop.permute.xlu0 %192
      %194 = vrot.lane.b32.xlu0 %v171, 126
      %v195 = vpop.permute.xlu0 %194
      %196 = vrot.lane.b32.xlu0 %v191, 126
      %v197 = vpop.permute.xlu0 %196
      %vm198 = vcmask 1031168
      %v199 = vsel %vm198, %v193, %v195
      %v200 = vsel %vm198, %v195, %v197
      %203 = vst [vmem:[#allocation2] sm:$0xf0] %v199
      %204 = vst [vmem:[#allocation2 + $0x8] sm:$0xf0] %v200
      %205 = vrot.lane.b32.xlu0 %v171, 124
      %v206 = vpop.permute.xlu0 %205
      %207 = vrot.lane.b32.xlu0 %v183, 124
      %v208 = vpop.permute.xlu0 %207
      %209 = vrot.lane.b32.xlu0 %v172, 124
      %v210 = vpop.permute.xlu0 %209
      %vm211 = vcmask 1014784
      %v212 = vsel %vm211, %v206, %v208
      %v213 = vsel %vm211, %v208, %v210
      %v216 = vsel %vm180, %v212, 0.0
      %v217 = vsel %vm181, %v213, 0.0
      %218 = vst [vmem:[#allocation2 + $0x10] sm:$0xf] %v216
      %219 = vst [vmem:[#allocation2 + $0x18] sm:$0xf] %v217
      %220 = vrot.lane.b32.xlu0 %v171, 96
      %v221 = vpop.permute.xlu0 %220
      %222 = vrot.lane.b32.xlu0 %v183, 96
      %v223 = vpop.permute.xlu0 %222
      %224 = vrot.lane.b32.xlu0 %v172, 96
      %v225 = vpop.permute.xlu0 %224
      %vm226 = vcmask 785408
      %v227 = vsel %vm226, %v221, %v223
      %v228 = vsel %vm226, %v223, %v225
      %v231 = vsel %vm178, %v227, 0.0
      %v232 = vsel %vm179, %v228, 0.0
      %v235 = vrot.slane %v231, 4
      %v236 = vrot.slane %v232, 4
      %239 = vst [vmem:[#allocation2 + $0x10] sm:$0xf0] %v235
      %240 = vst [vmem:[#allocation2 + $0x18] sm:$0xf0] %v236
      %241 = vrot.lane.b32.xlu0 %v171, 94
      %v242 = vpop.permute.xlu0 %241
      %243 = vrot.lane.b32.xlu0 %v183, 94
      %v244 = vpop.permute.xlu0 %243
      %245 = vrot.lane.b32.xlu0 %v172, 94
      %v246 = vpop.permute.xlu0 %245
      %vm247 = vcmask 769024
      %v248 = vsel %vm247, %v242, %v244
      %v249 = vsel %vm247, %v244, %v246
      %252 = vst [vmem:[#allocation2 + $0x20] sm:$0xf] %v248
      %253 = vst [vmem:[#allocation2 + $0x28] sm:$0xf] %v249
      %254 = vrot.lane.b32.xlu0 %v171, 92
      %v255 = vpop.permute.xlu0 %254
      %256 = vrot.lane.b32.xlu0 %v183, 92
      %v257 = vpop.permute.xlu0 %256
      %258 = vrot.lane.b32.xlu0 %v172, 92
      %v259 = vpop.permute.xlu0 %258
      %vm260 = vcmask 752640
      %v261 = vsel %vm260, %v255, %v257
      %v262 = vsel %vm260, %v257, %v259
      %v265 = vsel %vm180, %v261, 0.0
      %v266 = vsel %vm181, %v262, 0.0
      %v269 = vrot.slane %v265, 4
      %v270 = vrot.slane %v266, 4
      %273 = vst [vmem:[#allocation2 + $0x20] sm:$0xf0] %v269
      %274 = vst [vmem:[#allocation2 + $0x28] sm:$0xf0] %v270
      %275 = vrot.lane.b32.xlu0 %v171, 64
      %v276 = vpop.permute.xlu0 %275
      %277 = vrot.lane.b32.xlu0 %v183, 64
      %v278 = vpop.permute.xlu0 %277
      %279 = vrot.lane.b32.xlu0 %v172, 64
      %v280 = vpop.permute.xlu0 %279
      %vm281 = vcmask 523264
      %v282 = vsel %vm281, %v276, %v278
      %v283 = vsel %vm281, %v278, %v280
      %v286 = vsel %vm178, %v282, 0.0
      %v287 = vsel %vm179, %v283, 0.0
      %288 = vst [vmem:[#allocation2 + $0x30] sm:$0xf] %v286
      %289 = vst [vmem:[#allocation2 + $0x38] sm:$0xf] %v287
      %290 = vrot.lane.b32.xlu0 %v190, 62
      %v291 = vpop.permute.xlu0 %290
      %292 = vrot.lane.b32.xlu0 %v171, 62
      %v293 = vpop.permute.xlu0 %292
      %294 = vrot.lane.b32.xlu0 %v191, 62
      %v295 = vpop.permute.xlu0 %294
      %vm296 = vcmask 506880
      %v297 = vsel %vm296, %v291, %v293
      %v298 = vsel %vm296, %v293, %v295
      %301 = vst [vmem:[#allocation2 + $0x30] sm:$0xf0] %v297
      %302 = vst [vmem:[#allocation2 + $0x38] sm:$0xf0] %v298
      %303 = vrot.lane.b32.xlu0 %v171, 60
      %v304 = vpop.permute.xlu0 %303
      %305 = vrot.lane.b32.xlu0 %v183, 60
      %v306 = vpop.permute.xlu0 %305
      %307 = vrot.lane.b32.xlu0 %v172, 60
      %v308 = vpop.permute.xlu0 %307
      %vm309 = vcmask 490496
      %v310 = vsel %vm309, %v304, %v306
      %v311 = vsel %vm309, %v306, %v308
      %v314 = vsel %vm180, %v310, 0.0
      %v315 = vsel %vm181, %v311, 0.0
      %316 = vst [vmem:[#allocation2 + $0x40] sm:$0xf] %v314
      %317 = vst [vmem:[#allocation2 + $0x48] sm:$0xf] %v315
      %v318 = vld [vmem:[%s1] sm:$0xf]
      %v319 = vld [vmem:[#allocation2] sm:$0xff]
      %v320 = vld [vmem:[#allocation2 + $0x8] sm:$0xff]
      %v321 = vld [vmem:[#allocation2 + $0x10] sm:$0xff]
      %v322 = vld [vmem:[#allocation2 + $0x18] sm:$0xff]
      %v323 = vld [vmem:[#allocation2 + $0x20] sm:$0xff]
      %v324 = vld [vmem:[#allocation2 + $0x28] sm:$0xff]
      %v325 = vld [vmem:[#allocation2 + $0x30] sm:$0xff]
      %v326 = vld [vmem:[#allocation2 + $0x38] sm:$0xff]
      %v327 = vld [vmem:[#allocation2 + $0x40] sm:$0xf]
      %v328 = vld [vmem:[#allocation2 + $0x48] sm:$0xf]
      %v329 = vld [vmem:[%s2] sm:$0xf]
      %331 = vset.pattern.permute.xlu0 0
      %332 = vperm.xlu0 %331, %v329
      %v333 = vpop.permute.xlu0 %332
      %vm335 = vcmask 293888
      %v337 = vsel %vm335, %v318, 0
      %vm339 = vcmask 1043456
      %v341 = vsel %vm339, %v327, 0
      %v344 = vsel %vm339, %v328, 0
      %346 = vmatprep.subr.mxu0 %v320
      %347 = vmatpush1.msra.mxu0 %v319
      %348 = vmatprep.subr.mxu0 %v322
      %349 = vmatpush1.msra.mxu0 %v321
      %350 = vmatprep.subr.mxu0 %v324
      %351 = vmatpush1.msra.mxu0 %v323
      %352 = vmatprep.subr.mxu0 %v326
      %353 = vmatpush1.msra.mxu0 %v325
      %354 = vmatprep.subr.mxu0 %v344
      %355 = vmatpush1.msra.mxu0 %v341
      %356 = vmatprep.subr.mxu0 0.0
      %357 = vmatpush1.msra.mxu0 0.0
      %358 = vmatprep.subr.mxu0 0.0
      %359 = vmatpush1.msra.mxu0 0.0
      %360 = vmatprep.subr.mxu0 0.0
      %361 = vmatpush1.msra.mxu0 0.0
      %362 = vmatprep.subr.mxu0 0.0
      %363 = vmatpush1.msra.mxu0 0.0
      %364 = vmatprep.subr.mxu0 0.0
      %365 = vmatpush1.msra.mxu0 0.0
      %366 = vmatprep.subr.mxu0 0.0
      %367 = vmatpush1.msra.mxu0 0.0
      %368 = vmatprep.subr.mxu0 0.0
      %369 = vmatpush1.msra.mxu0 0.0
      %370 = vmatprep.subr.mxu0 0.0
      %371 = vmatpush1.msra.mxu0 0.0
      %372 = vmatprep.subr.mxu0 0.0
      %373 = vmatpush1.msra.mxu0 0.0
      %374 = vmatprep.subr.mxu0 0.0
      %375 = vmatpush1.msra.mxu0 0.0
      %376 = vmatprep.subr.mxu0 0.0
      %377 = vmatpush1.msra.mxu0 0.0
      %378 = vmatprep.subr.mxu0 0.0
      %379 = vmatpush1.msra.mxu0 0.0
      %380 = vmatprep.subr.mxu0 0.0
      %381 = vmatpush1.msra.mxu0 0.0
      %382 = vmatprep.subr.mxu0 0.0
      %383 = vmatpush1.msra.mxu0 0.0
      %384 = vmatprep.subr.mxu0 0.0
      %385 = vmatpush1.msra.mxu0 0.0
      %386 = vmatprep.subr.mxu0 0.0
      %387 = vmatpush1.msra.mxu0 0.0
      %388 = vmatprep.subr.mxu0 0.0
      %389 = vmatpush1.msra.mxu0 0.0
      %390 = vmatprep.subr.mxu0 0.0
      %391 = vmatpush1.msra.mxu0 0.0
      %392 = vmatprep.subr.mxu0 0.0
      %393 = vmatpush1.msra.mxu0 0.0
      %394 = vmatprep.subr.mxu0 0.0
      %395 = vmatpush1.msra.mxu0 0.0
      %396 = vmatprep.subr.mxu0 0.0
      %397 = vmatpush1.msra.mxu0 0.0
      %398 = vmatprep.subr.mxu0 0.0
      %399 = vmatpush1.msra.mxu0 0.0
      %400 = vmatprep.subr.mxu0 0.0
      %401 = vmatpush1.msra.mxu0 0.0
      %402 = vmatprep.subr.mxu0 0.0
      %403 = vmatpush1.msra.mxu0 0.0
      %404 = vmatprep.subr.mxu0 0.0
      %405 = vmatpush1.msra.mxu0 0.0
      %406 = vmatprep.subr.mxu0 0.0
      %407 = vmatpush1.msra.mxu0 0.0
      %408 = vmatprep.subr.mxu0 0.0
      %409 = vmatpush1.msra.mxu0 0.0
      %410 = vmatprep.mubr.f32.mxu0 0.0
      %411 = vmatmul.mubr.f32.gmra.mrb[0].mxu0 %v337
      %v412 = vpop.f32.mrb[0].mxu0
      %v413 = vadd.f32 %v333, %v412
      %v414 = vpop.f32.mrb[0].mxu0
      %v415 = vadd.f32 %v333, %v414
      %416 = vdwg.mxu0
      %v417 = vmax.f32 %v413, 0.0
      %v418 = vmax.f32 %v415, 0.0
      %419 = vst [vmem:[%s170] sm:$0xf] %v248
      %420 = vst [vmem:[%s170 + $0x8] sm:$0xf] %v249
      %v423 = vrot.slane %v417, 4
      %v424 = vrot.slane %v418, 4
      %427 = vst [vmem:[%s170] sm:$0xf0] %v423
      %428 = vst [vmem:[%s170 + $0x8] sm:$0xf0] %v424
      %p429 = scmp.lt.s32.totalorder %s14, 1
      %s430 = scalar_select %p429, %s14, 1
      %s431 = smul.addr %s430, 2
      %s432 = smul.addr %s431, 8
      %s433 = scalar_lea.vmem %s3, %s432
      // Predicated region
      $region33: #{make_dilation_dense.1} parent=31 // pred_check
        %p434 = pneg %p100
      $region34: #{make_dilation_dense.1} parent=31 // pred_check_branch
        %436 = sbr.rel (%p434) target = $region36
      $region35: #{make_dilation_dense.1} parent=31 // pred_region
        _
      $region36: #{make_dilation_dense.1} parent=31 // pred_fallthru
        _
    $region32: #{make_dilation_dense.1} parent=5 // pred_fallthru
      _
    %p437 = scmp.le.s32.totalorder 2, %s9
    // Predicated region
    $region37: #{make_dilation_dense.1} parent=5 // pred_check
      %p438 = pneg %p437
    $region38: #{make_dilation_dense.1} parent=5 // pred_check_branch
      %440 = sbr.rel (%p438) target = $region40
    $region39: #{make_dilation_dense.1} parent=5 // pred_region
      %s441 = ssub.s32 %s9, 2
      // Predicated region
      $region41: #{make_dilation_dense.1} parent=39 // pred_check
        %p442 = pneg %p106
      $region42: #{make_dilation_dense.1} parent=39 // pred_check_branch
        %444 = sbr.rel (%p442) target = $region44
      $region43: #{make_dilation_dense.1} parent=39 // pred_region
        %p445 = scmp.lt.s32.totalorder %s15, 1
        %s446 = scalar_select %p445, %s15, 1
        %s447 = smul.addr %s446, 2
        %s448 = smul.addr %s447, 8
        %s449 = scalar_lea.vmem %s3, %s448
      $region44: #{make_dilation_dense.1} parent=39 // pred_fallthru
        _
    $region40: #{make_dilation_dense.1} parent=5 // pred_fallthru
      _
  $region6: #{make_dilation_dense.1} parent=0 // loop_footer
    %s13 = sadd.s32 1, %s9
  $region7: #{make_dilation_dense.1} parent=0 // loop_footer_branch
    %8 = sbr.rel target = $region3
  $region8: #{make_dilation_dense.1} parent=0 // loop_exit
    _

</llo_original>
